<compile_context>
chip_gen: v7x
topology: tpu7x:2x2x1
jax: 0.10.0
libtpu: 0.0.40
codegen_flags: <defaults>
</compile_context>

<pallas_src>
import jax
import jax.numpy as jnp
from jax.experimental import pallas as pl
from jax.experimental.pallas import tpu as pltpu


def discriminator_kernel(xt_ref, w1_ref, b1_ref, w2_ref, b2_ref, o_ref):
    # xt: (7, TN)  -- batch on lanes
    xt = xt_ref[...]
    # Linear(7, 8):  (8,7) @ (7,TN) -> (8,TN)
    h = jnp.dot(w1_ref[...], xt, preferred_element_type=jnp.float32)
    h = h + b1_ref[...]                       # (8,TN) + (8,1) broadcast
    # LeakyReLU(0.2)
    h = jnp.where(h >= 0, h, 0.2 * h)
    # Linear(8, 1):  (1,8) @ (8,TN) -> (1,TN)
    y = jnp.dot(w2_ref[...], h, preferred_element_type=jnp.float32)
    y = y + b2_ref[...]                       # (1,TN) + (1,1)
    # Sigmoid (exp on EUP, elementwise on VPU)
    o_ref[...] = 1.0 / (1.0 + jnp.exp(-y))


def _round_up(x, m):
    return ((x + m - 1) // m) * m


def discriminator_forward(x, w1, b1, w2, b2, *, max_block_n=2048):
    """x: (N, 7) float32.  Returns (N, 1) float32 == sigmoid(LReLU(x@W1.T+b1)@W2.T+b2)."""
    n, in_f = x.shape
    hid = w1.shape[0]          # 8
    out_f = w2.shape[0]        # 1

    # Lane-major layout: batch on lanes. Pad batch to a multiple of the tile.
    block_n = min(max_block_n, _round_up(n, 128))
    n_pad = _round_up(n, block_n)
    xt = x.T                                              # (7, N)
    if n_pad != n:
        xt = jnp.pad(xt, ((0, 0), (0, n_pad - n)))
    grid = (n_pad // block_n,)

    out_t = pl.pallas_call(
        discriminator_kernel,
        out_shape=jax.ShapeDtypeStruct((out_f, n_pad), jnp.float32),
        grid_spec=pltpu.PrefetchScalarGridSpec(
            num_scalar_prefetch=0,
            grid=grid,
            in_specs=[
                # batch-tiled activations, lane-dense
                pl.BlockSpec((in_f, block_n), lambda i: (0, i)),
                # weights / biases: constant index_map -> resident across steps
                pl.BlockSpec((hid, in_f), lambda i: (0, 0)),
                pl.BlockSpec((hid, 1), lambda i: (0, 0)),
                pl.BlockSpec((out_f, hid), lambda i: (0, 0)),
                pl.BlockSpec((out_f, 1), lambda i: (0, 0)),
            ],
            out_specs=pl.BlockSpec((out_f, block_n), lambda i: (0, i)),
        ),
        compiler_params=pltpu.CompilerParams(
            dimension_semantics=("parallel",),   # megacore shards batch tiles
        ),
    )(xt, w1, b1, w2, b2)

    return out_t[:, :n].T                                 # (N, 1)


def init_discriminator_params(key):
    """PyTorch nn.Linear default init: uniform(-1/sqrt(fan_in), 1/sqrt(fan_in))."""
    k1, k2, k3, k4 = jax.random.split(key, 4)
    bound1 = 1.0 / jnp.sqrt(7.0)
    bound2 = 1.0 / jnp.sqrt(8.0)
    # Stored PyTorch-style: W is (out_features, in_features); biases as columns.
    w1 = jax.random.uniform(k1, (8, 7), jnp.float32, -bound1, bound1)
    b1 = jax.random.uniform(k2, (8, 1), jnp.float32, -bound1, bound1)
    w2 = jax.random.uniform(k3, (1, 8), jnp.float32, -bound2, bound2)
    b2 = jax.random.uniform(k4, (1, 1), jnp.float32, -bound2, bound2)
    return w1, b1, w2, b2


def reference_forward(x, w1, b1, w2, b2):
    hi = jax.lax.Precision.HIGHEST
    h = jnp.dot(x, w1.T, precision=hi) + b1.T             # (N, 8)
    h = jnp.where(h >= 0, h, 0.2 * h)
    y = jnp.dot(h, w2.T, precision=hi) + b2.T             # (N, 1)
    return 1.0 / (1.0 + jnp.exp(-y))


if __name__ == "__main__":
    key = jax.random.PRNGKey(0)
    k_params, k_x = jax.random.split(key)

    # Small COMPAS-style batch: 16 samples, 7 features each.
    x = jax.random.normal(k_x, (16, 7), dtype=jnp.float32)
    w1, b1, w2, b2 = init_discriminator_params(k_params)

    out = discriminator_forward(x, w1, b1, w2, b2)
    out = jax.block_until_ready(out)

    ref = reference_forward(x, w1, b1, w2, b2)
    assert out.shape == (16, 1), out.shape
    assert jnp.allclose(out, ref, atol=1e-4, rtol=1e-4), "mismatch vs reference"

    print("KERNEL_OK")
</pallas_src>

<mosaic_0001>
module attributes {stable_mosaic.version = 11 : i64} {
  func.func @discriminator_kernel(%arg0: i32, %arg1: memref<7x128xf32, #tpu.memory_space<vmem>>, %arg2: memref<8x7xf32, #tpu.memory_space<vmem>>, %arg3: memref<8x1xf32, #tpu.memory_space<vmem>>, %arg4: memref<1x8xf32, #tpu.memory_space<vmem>>, %arg5: memref<1x1xf32, #tpu.memory_space<vmem>>, %arg6: memref<1x128xf32, #tpu.memory_space<vmem>>) attributes {dimension_semantics = [#tpu.dimension_semantics<parallel>], iteration_bounds = array<i64: 1>, scalar_prefetch = 0 : i64, scratch_operands = 0 : i64, tpu.core_type = #tpu.core_type<tc>, window_params = [{transform_indices = @transform_0, window_bounds = array<i64: 7, 128>}, {pipeline_mode = #tpu.pipeline_mode<synchronous>, transform_indices = @transform_1, window_bounds = array<i64: 8, 7>}, {pipeline_mode = #tpu.pipeline_mode<synchronous>, transform_indices = @transform_2, window_bounds = array<i64: 8, 1>}, {pipeline_mode = #tpu.pipeline_mode<synchronous>, transform_indices = @transform_3, window_bounds = array<i64: 1, 8>}, {pipeline_mode = #tpu.pipeline_mode<synchronous>, transform_indices = @transform_4, window_bounds = array<i64: 1, 1>}, {transform_indices = @transform_5, window_bounds = array<i64: 1, 128>}]} {
    %c0 = arith.constant 0 : index
    %c0_0 = arith.constant 0 : index
    %0 = vector.load %arg1[%c0, %c0_0] : memref<7x128xf32, #tpu.memory_space<vmem>>, vector<7x128xf32>
    %c0_1 = arith.constant 0 : index
    %c0_2 = arith.constant 0 : index
    %1 = vector.load %arg2[%c0_1, %c0_2] : memref<8x7xf32, #tpu.memory_space<vmem>>, vector<8x7xf32>
    %cst = arith.constant dense<0.000000e+00> : vector<8x128xf32>
    %2 = tpu.matmul %1, %0, %cst {dimension_numbers = #tpu.dot_dimension_numbers<[1], [0], [0], [1], [0, 0, 1, 1], [], []>} : vector<8x7xf32>, vector<7x128xf32>, vector<8x128xf32> -> vector<8x128xf32>
    %c0_3 = arith.constant 0 : index
    %c0_4 = arith.constant 0 : index
    %3 = vector.load %arg3[%c0_3, %c0_4] : memref<8x1xf32, #tpu.memory_space<vmem>>, vector<8x1xf32>
    %4 = vector.broadcast %3 : vector<8x1xf32> to vector<8x128xf32>
    %5 = arith.addf %2, %4 : vector<8x128xf32>
    %cst_5 = arith.constant 0.000000e+00 : f32
    %6 = vector.broadcast %cst_5 : f32 to vector<8x128xf32>
    %7 = arith.cmpf oge, %5, %6 : vector<8x128xf32>
    %cst_6 = arith.constant 2.000000e-01 : f32
    %8 = vector.broadcast %cst_6 : f32 to vector<8x128xf32>
    %9 = arith.mulf %8, %5 : vector<8x128xf32>
    %10 = arith.select %7, %5, %9 : vector<8x128xi1>, vector<8x128xf32>
    %c0_7 = arith.constant 0 : index
    %c0_8 = arith.constant 0 : index
    %11 = vector.load %arg4[%c0_7, %c0_8] : memref<1x8xf32, #tpu.memory_space<vmem>>, vector<1x8xf32>
    %cst_9 = arith.constant dense<0.000000e+00> : vector<1x128xf32>
    %12 = tpu.matmul %11, %10, %cst_9 {dimension_numbers = #tpu.dot_dimension_numbers<[1], [0], [0], [1], [0, 0, 1, 1], [], []>} : vector<1x8xf32>, vector<8x128xf32>, vector<1x128xf32> -> vector<1x128xf32>
    %c0_10 = arith.constant 0 : index
    %c0_11 = arith.constant 0 : index
    %13 = vector.load %arg5[%c0_10, %c0_11] : memref<1x1xf32, #tpu.memory_space<vmem>>, vector<1x1xf32>
    %14 = vector.broadcast %13 : vector<1x1xf32> to vector<1x128xf32>
    %15 = arith.addf %12, %14 : vector<1x128xf32>
    %cst_12 = arith.constant 0.000000e+00 : f32
    %16 = vector.broadcast %cst_12 : f32 to vector<1x128xf32>
    %17 = arith.subf %16, %15 : vector<1x128xf32>
    %18 = math.exp %17 : vector<1x128xf32>
    %cst_13 = arith.constant 1.000000e+00 : f32
    %19 = vector.broadcast %cst_13 : f32 to vector<1x128xf32>
    %20 = arith.addf %19, %18 : vector<1x128xf32>
    %cst_14 = arith.constant 1.000000e+00 : f32
    %21 = vector.broadcast %cst_14 : f32 to vector<1x128xf32>
    %22 = arith.divf %21, %20 : vector<1x128xf32>
    %c0_15 = arith.constant 0 : index
    %c0_16 = arith.constant 0 : index
    %23 = vector.load %arg6[%c0_15, %c0_16] : memref<1x128xf32, #tpu.memory_space<vmem>>, vector<1x128xf32>
    tpu.vector_store %arg6[%c0_15, %c0_16], %22 {strides = array<i32>} : memref<1x128xf32, #tpu.memory_space<vmem>>, vector<1x128xf32>,
    return
  }
  func.func @transform_0(%arg0: i32) -> (i32, i32) {
    %c0_i32 = arith.constant 0 : i32
    %c0_i32_0 = arith.constant 0 : i32
    return %c0_i32, %arg0 : i32, i32
  }
  func.func @transform_1(%arg0: i32) -> (i32, i32) {
    %c0_i32 = arith.constant 0 : i32
    %c0_i32_0 = arith.constant 0 : i32
    %c0_i32_1 = arith.constant 0 : i32
    return %c0_i32, %c0_i32_0 : i32, i32
  }
  func.func @transform_2(%arg0: i32) -> (i32, i32) {
    %c0_i32 = arith.constant 0 : i32
    %c0_i32_0 = arith.constant 0 : i32
    %c0_i32_1 = arith.constant 0 : i32
    return %c0_i32, %c0_i32_0 : i32, i32
  }
  func.func @transform_3(%arg0: i32) -> (i32, i32) {
    %c0_i32 = arith.constant 0 : i32
    %c0_i32_0 = arith.constant 0 : i32
    %c0_i32_1 = arith.constant 0 : i32
    return %c0_i32, %c0_i32_0 : i32, i32
  }
  func.func @transform_4(%arg0: i32) -> (i32, i32) {
    %c0_i32 = arith.constant 0 : i32
    %c0_i32_0 = arith.constant 0 : i32
    %c0_i32_1 = arith.constant 0 : i32
    return %c0_i32, %c0_i32_0 : i32, i32
  }
  func.func @transform_5(%arg0: i32) -> (i32, i32) {
    %c0_i32 = arith.constant 0 : i32
    %c0_i32_0 = arith.constant 0 : i32
    return %c0_i32, %arg0 : i32, i32
  }
}

</mosaic_0001>

<llo_original>
// kernel: tpu_custom_call.1
$region0: #{tpu_custom_call.1}
  #allocation0 [shape = 'u32[]', space=smem, size = 0x4, offset = 0x4, fixed_abs, tag = 'smem constant byte address 0x4 - core index']
  #allocation1 [shape = 'u32[144,128]{1,0:T(1,128)}', space=vmem, size = 0x12000, scoped, tag = 'internal scratch']
  #allocation2 [shape = 'f32[1,1]{1,0:T(1,128)S(1)}', space=vmem, size = 0x200, scoped, tag = 'scoped memory for tpu_custom_call.1']
  %s0 = inlined_call_operand.vmem [shape: f32[7,128], index: 0, kind: input, shape index: {}]
  %s1 = inlined_call_operand.vmem [shape: f32[8,7], index: 1, kind: input, shape index: {}]
  %s2 = inlined_call_operand.vmem [shape: f32[8,1], index: 2, kind: input, shape index: {}]
  %s3 = inlined_call_operand.vmem [shape: f32[1,8], index: 3, kind: input, shape index: {}]
  %s4 = inlined_call_operand.<no memory space> [shape: f32[1,1], index: 4, kind: input, shape index: {}]
  %s5 = inlined_call_operand.hbm [shape: f32[1,128], index: 5, kind: output, shape index: {}]
  %s6 = sld [smem:[#allocation0]]
  $region30: #{tpu_custom_call.1} parent=0
    _
  %s8 = ssub.s32 1, %s6
  %s9 = scalar_select 0, %s8, %s6
  %v10 = vstv %s4
  %11 = vst [vmem:[#allocation2] sm:$0x1] %v10
  $region1: #{tpu_custom_call.1} parent=0
    #allocation3 [shape = 'u8[512]{0}', space=vmem, size = 0x400, scoped, tag = 'output window, operand 0, single buffered']
    #allocation4 [shape = 's32[1]{0}', space=sflag, size = 0x4, scoped, tag = 'scoped memory for tpu_custom_call.1']
    %12 = vsyncpa [#allocation4], 0
    // Predicated region
    $region2: #{tpu_custom_call.1} parent=1 // pred_check
      _
    $region3: #{tpu_custom_call.1} parent=1 // pred_check_branch
      %14 = sbr.rel (0) target = $region5
    $region4: #{tpu_custom_call.1} parent=1 // pred_region
      _
    $region5: #{tpu_custom_call.1} parent=1 // pred_fallthru
      _
    // Predicated region
    $region6: #{tpu_custom_call.1} parent=1 // pred_check
      _
    $region7: #{tpu_custom_call.1} parent=1 // pred_check_branch
      %16 = sbr.rel (0) target = $region9
    $region8: #{tpu_custom_call.1} parent=1 // pred_region
      _
    $region9: #{tpu_custom_call.1} parent=1 // pred_fallthru
      _
    // Predicated region
    $region10: #{tpu_custom_call.1} parent=1 // pred_check
      _
    $region11: #{tpu_custom_call.1} parent=1 // pred_check_branch
      %18 = sbr.rel (0) target = $region13
    $region12: #{tpu_custom_call.1} parent=1 // pred_region
      _
    $region13: #{tpu_custom_call.1} parent=1 // pred_fallthru
      _
    // Predicated region
    $region14: #{tpu_custom_call.1} parent=1 // pred_check
      _
    $region15: #{tpu_custom_call.1} parent=1 // pred_check_branch
      %20 = sbr.rel (0) target = $region17
    $region16: #{tpu_custom_call.1} parent=1 // pred_region
      _
    $region17: #{tpu_custom_call.1} parent=1 // pred_fallthru
      _
    // Predicated region
    $region18: #{tpu_custom_call.1} parent=1 // pred_check
      _
    $region19: #{tpu_custom_call.1} parent=1 // pred_check_branch
      %22 = sbr.rel (0) target = $region21
    $region20: #{tpu_custom_call.1} parent=1 // pred_region
      _
    $region21: #{tpu_custom_call.1} parent=1 // pred_fallthru
      _
    %v23 = vld [vmem:[%s0] sm:$0x7f]
    %v24 = vld [vmem:[%s1] sm:$0xff]
    %v25 = vld [vmem:[%s2] sm:$0xff]
    %27 = vset.pattern.permute.xlu0 0
    %28 = vperm.xlu0 %27, %v25
    %v29 = vpop.permute.xlu0 %28
    %vm31 = vcmask 56320
    %v33 = vsel %vm31, %v24, 0
    %vm35 = vcmask 1046528
    %v37 = vsel %vm35, %v23, 0
    %39 = vmatprep.subr.mxu0 0.0
    %40 = vmatpush1.msra.mxu0 %v37
    %41 = vmatprep.subr.mxu0 0.0
    %42 = vmatpush1.msra.mxu0 0.0
    %43 = vmatprep.subr.mxu0 0.0
    %44 = vmatpush1.msra.mxu0 0.0
    %45 = vmatprep.subr.mxu0 0.0
    %46 = vmatpush1.msra.mxu0 0.0
    %47 = vmatprep.subr.mxu0 0.0
    %48 = vmatpush1.msra.mxu0 0.0
    %49 = vmatprep.subr.mxu0 0.0
    %50 = vmatpush1.msra.mxu0 0.0
    %51 = vmatprep.subr.mxu0 0.0
    %52 = vmatpush1.msra.mxu0 0.0
    %53 = vmatprep.subr.mxu0 0.0
    %54 = vmatpush1.msra.mxu0 0.0
    %55 = vmatprep.subr.mxu0 0.0
    %56 = vmatpush1.msra.mxu0 0.0
    %57 = vmatprep.subr.mxu0 0.0
    %58 = vmatpush1.msra.mxu0 0.0
    %59 = vmatprep.subr.mxu0 0.0
    %60 = vmatpush1.msra.mxu0 0.0
    %61 = vmatprep.subr.mxu0 0.0
    %62 = vmatpush1.msra.mxu0 0.0
    %63 = vmatprep.subr.mxu0 0.0
    %64 = vmatpush1.msra.mxu0 0.0
    %65 = vmatprep.subr.mxu0 0.0
    %66 = vmatpush1.msra.mxu0 0.0
    %67 = vmatprep.subr.mxu0 0.0
    %68 = vmatpush1.msra.mxu0 0.0
    %69 = vmatprep.subr.mxu0 0.0
    %70 = vmatpush1.msra.mxu0 0.0
    %71 = vmatprep.subr.mxu0 0.0
    %72 = vmatpush1.msra.mxu0 0.0
    %73 = vmatprep.subr.mxu0 0.0
    %74 = vmatpush1.msra.mxu0 0.0
    %75 = vmatprep.subr.mxu0 0.0
    %76 = vmatpush1.msra.mxu0 0.0
    %77 = vmatprep.subr.mxu0 0.0
    %78 = vmatpush1.msra.mxu0 0.0
    %79 = vmatprep.subr.mxu0 0.0
    %80 = vmatpush1.msra.mxu0 0.0
    %81 = vmatprep.subr.mxu0 0.0
    %82 = vmatpush1.msra.mxu0 0.0
    %83 = vmatprep.subr.mxu0 0.0
    %84 = vmatpush1.msra.mxu0 0.0
    %85 = vmatprep.subr.mxu0 0.0
    %86 = vmatpush1.msra.mxu0 0.0
    %87 = vmatprep.subr.mxu0 0.0
    %88 = vmatpush1.msra.mxu0 0.0
    %89 = vmatprep.subr.mxu0 0.0
    %90 = vmatpush1.msra.mxu0 0.0
    %91 = vmatprep.subr.mxu0 0.0
    %92 = vmatpush1.msra.mxu0 0.0
    %93 = vmatprep.subr.mxu0 0.0
    %94 = vmatpush1.msra.mxu0 0.0
    %95 = vmatprep.subr.mxu0 0.0
    %96 = vmatpush1.msra.mxu0 0.0
    %97 = vmatprep.subr.mxu0 0.0
    %98 = vmatpush1.msra.mxu0 0.0
    %99 = vmatprep.subr.mxu0 0.0
    %100 = vmatpush1.msra.mxu0 0.0
    %101 = vmatprep.subr.mxu0 0.0
    %102 = vmatpush1.msra.mxu0 0.0
    %103 = vmatprep.mubr.f32.mxu0 0.0
    %104 = vmatmul.mubr.f32.gmra.mrb[0].mxu0 %v33
    %v105 = vpop.f32.mrb[0].mxu0
    %v106 = vadd.f32 %v29, %v105
    %v107 = vpop.f32.mrb[0].mxu0
    %108 = vdwg.mxu0
    %vm109 = vcmp.ge.f32.partialorder %v106, 0.0
    %v110 = vmul.f32 %v106, 0.2
    %v111 = vsel %vm109, %v106, %v110
    %v112 = vld [vmem:[%s3] sm:$0x1]
    %v113 = vld [vmem:[#allocation2] sm:$0x1]
    %115 = vset.pattern.permute.xlu0 0
    %116 = vperm.xlu0 %115, %v113
    %v117 = vpop.permute.xlu0 %116
    %v119 = vlaneseq
    %v120 = vshrl.u32 %v119, 7
    %v121 = vsub.s32 0, %v120
    %v122 = vrot.slane %v117, %v121
    %vm123 = vcmask 64512
    %v125 = vsel %vm123, %v112, 0
    %127 = vmatprep.subr.mxu0 0.0
    %128 = vmatpush1.msra.mxu0 %v111
    %129 = vmatprep.subr.mxu0 0.0
    %130 = vmatpush1.msra.mxu0 0.0
    %131 = vmatprep.subr.mxu0 0.0
    %132 = vmatpush1.msra.mxu0 0.0
    %133 = vmatprep.subr.mxu0 0.0
    %134 = vmatpush1.msra.mxu0 0.0
    %135 = vmatprep.subr.mxu0 0.0
    %136 = vmatpush1.msra.mxu0 0.0
    %137 = vmatprep.subr.mxu0 0.0
    %138 = vmatpush1.msra.mxu0 0.0
    %139 = vmatprep.subr.mxu0 0.0
    %140 = vmatpush1.msra.mxu0 0.0
    %141 = vmatprep.subr.mxu0 0.0
    %142 = vmatpush1.msra.mxu0 0.0
    %143 = vmatprep.subr.mxu0 0.0
    %144 = vmatpush1.msra.mxu0 0.0
    %145 = vmatprep.subr.mxu0 0.0
    %146 = vmatpush1.msra.mxu0 0.0
    %147 = vmatprep.subr.mxu0 0.0
    %148 = vmatpush1.msra.mxu0 0.0
    %149 = vmatprep.subr.mxu0 0.0
    %150 = vmatpush1.msra.mxu0 0.0
    %151 = vmatprep.subr.mxu0 0.0
    %152 = vmatpush1.msra.mxu0 0.0
    %153 = vmatprep.subr.mxu0 0.0
    %154 = vmatpush1.msra.mxu0 0.0
    %155 = vmatprep.subr.mxu0 0.0
    %156 = vmatpush1.msra.mxu0 0.0
    %157 = vmatprep.subr.mxu0 0.0
    %158 = vmatpush1.msra.mxu0 0.0
    %159 = vmatprep.subr.mxu0 0.0
    %160 = vmatpush1.msra.mxu0 0.0
    %161 = vmatprep.subr.mxu0 0.0
    %162 = vmatpush1.msra.mxu0 0.0
    %163 = vmatprep.subr.mxu0 0.0
    %164 = vmatpush1.msra.mxu0 0.0
    %165 = vmatprep.subr.mxu0 0.0
    %166 = vmatpush1.msra.mxu0 0.0
    %167 = vmatprep.subr.mxu0 0.0
    %168 = vmatpush1.msra.mxu0 0.0
    %169 = vmatprep.subr.mxu0 0.0
    %170 = vmatpush1.msra.mxu0 0.0
    %171 = vmatprep.subr.mxu0 0.0
    %172 = vmatpush1.msra.mxu0 0.0
    %173 = vmatprep.subr.mxu0 0.0
    %174 = vmatpush1.msra.mxu0 0.0
    %175 = vmatprep.subr.mxu0 0.0
    %176 = vmatpush1.msra.mxu0 0.0
    %177 = vmatprep.subr.mxu0 0.0
    %178 = vmatpush1.msra.mxu0 0.0
    %179 = vmatprep.subr.mxu0 0.0
    %180 = vmatpush1.msra.mxu0 0.0
    %181 = vmatprep.subr.mxu0 0.0
    %182 = vmatpush1.msra.mxu0 0.0
    %183 = vmatprep.subr.mxu0 0.0
    %184 = vmatpush1.msra.mxu0 0.0
    %185 = vmatprep.subr.mxu0 0.0
    %186 = vmatpush1.msra.mxu0 0.0
    %187 = vmatprep.subr.mxu0 0.0
    %188 = vmatpush1.msra.mxu0 0.0
    %189 = vmatprep.subr.mxu0 0.0
    %190 = vmatpush1.msra.mxu0 0.0
    %191 = vmatprep.mubr.f32.mxu0 0.0
    %192 = vmatmul.mubr.f32.gmra.mrb[0].mxu0 %v125
    %v193 = vpop.f32.mrb[0].mxu0
    %v194 = vadd.f32 %v122, %v193
    %v195 = vpop.f32.mrb[0].mxu0
    %196 = vdwg.mxu0
    %v197 = vsub.f32 0.0, %v194
    %v198 = vmul.f32 %v197, 1.442695
    %v199 = vpow.pop %v198
    %v200 = vadd.f32 %v199, 1.0
    %v201 = vrcp.pop %v200
    %v202 = vmul.f32 1.0, %v201
    %203 = vst [vmem:[#allocation3] sm:$0x1] %v202
    // Predicated region
    $region22: #{tpu_custom_call.1} parent=1 // pred_check
      _
    $region23: #{tpu_custom_call.1} parent=1 // pred_check_branch
      %205 = sbr.rel (0) target = $region25
    $region24: #{tpu_custom_call.1} parent=1 // pred_region
      %s207 = ssub.s32 16, 16
      %208 = vsyncadd [#allocation4], %s207
      %s210 = sshll.u32 [#allocation3], 4
      %s211 = int_to_ptr.vmem [resolvable:$true] %s210
      %213 = dma.vmem_to_hbm [thread:$0]  %s211, 16, %s5, [#allocation4]
    $region25: #{tpu_custom_call.1} parent=1 // pred_fallthru
      _
    // Predicated region
    $region26: #{tpu_custom_call.1} parent=1 // pred_check
      _
    $region27: #{tpu_custom_call.1} parent=1 // pred_check_branch
      %215 = sbr.rel (0) target = $region29
    $region28: #{tpu_custom_call.1} parent=1 // pred_region
      %216 = dma.done [#allocation4], 16
    $region29: #{tpu_custom_call.1} parent=1 // pred_fallthru
      _
    %217 = vsyncpa [#allocation4], 1

</llo_original>
